<compile_context>
chip_gen: v5e
topology: v5e:2x2
jax: 0.10.0
libtpu: 0.0.40
codegen_flags: <defaults>
</compile_context>

<pallas_src>
import functools

import jax
import jax.numpy as jnp
from jax.experimental import pallas as pl
from jax.experimental.pallas import tpu as pltpu

LANE = 128          # TPU lane width; channel dims are padded to this
SUBLANE = 8         # sublane granule; per-graph node counts padded to this
NUM_LAYERS = 4


def _round_up(v, m):
    return ((v + m - 1) // m) * m


def _vmem_limit_bytes():
    """Explicit scoped-VMEM limit sized to the device generation
    (~109 MiB on v5e/v6e's 128 MiB, ~54 MiB on v7x's 64 MiB)."""
    try:
        cap = int(pltpu.get_tpu_info().vmem_capacity_bytes)
        return max(32 * 1024 * 1024, int(cap * 0.85))
    except Exception:
        return 48 * 1024 * 1024


# --------------------------------------------------------------------------
# Fused kernel: per graph, 4 x (ChebConv + BN(eval) + ReLU) + node/graph heads
# grid = (B, NUM_LAYERS); graph axis "parallel", layer axis "arbitrary".
# L / x / head weights use graph- or layer-only block indices (resident while
# needed); the running activation lives in a bf16 VMEM scratch across layers.
# --------------------------------------------------------------------------
def _cgcn_fused_kernel(L_ref, x_ref, w_ref, sc_ref, sh_ref, wn_ref, wg_ref,
                       bias_ref, nodes_ref, graph_ref, h_ref, *, Ks):
    layer = pl.program_id(1)

    # Layer 0: seed the activation scratch with this graph's padded input.
    @pl.when(layer == 0)
    def _():
        h_ref[...] = x_ref[0]

    L = L_ref[0]                                     # bf16 [N_pad, N_pad]
    T0 = h_ref[...]                                  # bf16 [N_pad, C]

    # Chebyshev recurrence: f32 carries, bf16 MXU operands.
    txs = [T0]
    if Ks > 1:
        Tm2 = T0.astype(jnp.float32)
        T1 = jnp.dot(L, T0, preferred_element_type=jnp.float32)
        txs.append(T1.astype(jnp.bfloat16))
        Tm1 = T1
        for _ in range(2, Ks):
            Tk = 2.0 * jnp.dot(L, txs[-1],
                               preferred_element_type=jnp.float32) - Tm2
            txs.append(Tk.astype(jnp.bfloat16))
            Tm2, Tm1 = Tm1, Tk

    # One MXU matmul over all Chebyshev orders: [N_pad, Ks*C] @ [Ks*C, C].
    # (On v5e/v6e the single concat matmul with a large K is cheapest; see
    #  TODO(synk) above for the v7x per-order MRB-accumulation variant.)
    txcat = jnp.concatenate(txs, axis=-1)
    out = jnp.dot(txcat, w_ref[0], preferred_element_type=jnp.float32)

    # BatchNorm (eval) with the ChebConv bias folded into the shift, then ReLU.
    out = out * sc_ref[0] + sh_ref[0]
    h_new = jnp.maximum(out, 0.0)                    # f32 [N_pad, C]
    h_ref[...] = h_new.astype(jnp.bfloat16)

    # Last layer: fused node / graph heads for this graph.  Padded channels
    # are exactly zero and the head weights are zero-padded, so the padded
    # lanes / rows contribute nothing.  VPU multiply + reduce instead of a
    # 1-lane-wide MXU matmul.
    @pl.when(layer == pl.num_programs(1) - 1)
    def _():
        nodes = jnp.sum(h_new * wn_ref[...], axis=-1, keepdims=True)
        nodes_ref[...] = nodes + bias_ref[0]                       # [N_pad, 1]
        per_node = jnp.sum(h_new * wg_ref[...], axis=-1, keepdims=True)
        g = jnp.sum(per_node, axis=0, keepdims=True) + bias_ref[1]  # [1, 1]
        graph_ref[...] = g.reshape(1, 1, 1)


# --------------------------------------------------------------------------
# Host-side packing: lane-pad channels, fold bias into BN, stack per layer
# --------------------------------------------------------------------------
def pack_params(params, u, Ks, C, N_pad, num_nodes):
    W_all, scale_all, shift_all = [], [], []
    for i in range(NUM_LAYERS):
        W = params[f"W{i}"]                       # [Ks, Cin_i, u]
        b = params[f"b{i}"][0]                    # [u]
        scale = params[f"bn_scale{i}"][0]         # [u]
        shift = params[f"bn_shift{i}"][0]         # [u]
        cin = W.shape[1]
        Wp = jnp.zeros((Ks, C, C), jnp.float32).at[:, :cin, :u].set(W)
        W_all.append(Wp.reshape(Ks * C, C))
        scale_all.append(jnp.zeros((C,), jnp.float32).at[:u].set(scale))
        # fold ChebConv bias: (y + b)*scale + shift == y*scale + (b*scale+shift)
        shift_all.append(
            jnp.zeros((C,), jnp.float32).at[:u].set(b * scale + shift))
    return {
        "W_all": jnp.stack(W_all).astype(jnp.bfloat16),        # [4, Ks*C, C]
        "scale_all": jnp.stack(scale_all)[:, None, :],         # [4, 1, C]
        "shift_all": jnp.stack(shift_all)[:, None, :],         # [4, 1, C]
        "w_node": jnp.zeros((1, C), jnp.float32).at[0, :u].set(
            params["w_node"][:, 0]),                           # [1, C]
        "w_graph": jnp.zeros((N_pad, C), jnp.float32).at[:num_nodes, :u].set(
            params["w_graph"]),                                # [N_pad, C]
        "head_bias": jnp.stack([params["b_node"][0, 0],
                                params["b_graph"][0, 0]]),     # [2] (SMEM)
    }


def build_block_laplacian(edge_index, weights, batch_size, num_nodes, n_pad):
    """Per-graph L_hat = -D^{-1/2} A D^{-1/2} (PyG ChebConv 'sym', lambda_max=2).
    Assumes nodes are sorted by graph with exactly num_nodes each and no
    cross-graph edges (standard PyG batching), so only the B diagonal NxN
    blocks of the batched Laplacian are nonzero."""
    n_total = batch_size * num_nodes
    src, dst = edge_index[0], edge_index[1]
    noself = (src != dst).astype(weights.dtype)
    w = weights * noself
    A = jnp.zeros((n_total, n_total), jnp.float32).at[dst, src].add(w)
    deg = A.sum(axis=1)
    dinv = jnp.where(deg > 0, 1.0 / jnp.sqrt(deg), 0.0)
    L = -(dinv[:, None] * A * dinv[None, :])
    Lb = L.reshape(batch_size, num_nodes, batch_size, num_nodes)
    idx = jnp.arange(batch_size)
    L_diag = Lb[idx, :, idx, :]                                 # [B, N, N]
    return (jnp.zeros((batch_size, n_pad, n_pad), jnp.float32)
            .at[:, :num_nodes, :num_nodes].set(L_diag))


def fold_bn(gamma, beta, running_mean, running_var, eps=1e-5):
    scale = gamma / jnp.sqrt(running_var + eps)
    shift = beta - running_mean * scale
    return scale[None, :], shift[None, :]


def init_params(key, in_channels, u, Ks, num_nodes):
    ks = jax.random.split(key, 16)
    p = {}
    dims = [in_channels, u, u, u]
    for i in range(NUM_LAYERS):
        cin = dims[i]
        p[f"W{i}"] = 0.1 * jax.random.normal(ks[2 * i], (Ks, cin, u), jnp.float32)
        p[f"b{i}"] = 0.05 * jax.random.normal(ks[2 * i + 1], (1, u), jnp.float32)
        gamma = 1.0 + 0.1 * jax.random.normal(ks[8 + i], (u,), jnp.float32)
        beta = 0.05 * jax.random.normal(ks[8 + i], (u,), jnp.float32)
        rmean = jnp.zeros((u,), jnp.float32)
        rvar = jnp.ones((u,), jnp.float32)
        p[f"bn_scale{i}"], p[f"bn_shift{i}"] = fold_bn(gamma, beta, rmean, rvar)
    p["w_node"] = 0.1 * jax.random.normal(ks[12], (u, 1), jnp.float32)
    p["b_node"] = jnp.array([[0.01]], jnp.float32)
    p["w_graph"] = 0.01 * jax.random.normal(ks[13], (num_nodes, u), jnp.float32)
    p["b_graph"] = jnp.array([[-0.02]], jnp.float32)
    return p


def _prepare_inputs(params, x, edge_index, weights, num_nodes, batch_size,
                    in_channels, u, Ks):
    C = max(_round_up(u, LANE), LANE)
    N_pad = max(_round_up(num_nodes, SUBLANE), SUBLANE)
    packed = pack_params(params, u, Ks, C, N_pad, num_nodes)
    L = build_block_laplacian(edge_index, weights, batch_size, num_nodes,
                              N_pad).astype(jnp.bfloat16)          # [B,Np,Np]
    x_pad = (jnp.zeros((batch_size, N_pad, C), jnp.float32)
             .at[:, :num_nodes, :in_channels]
             .set(x.reshape(batch_size, num_nodes, in_channels))
             .astype(jnp.bfloat16))                                 # [B,Np,C]
    return L, x_pad, packed, C, N_pad


# --------------------------------------------------------------------------
# Forward pass: one fused pallas_call for the whole network
# --------------------------------------------------------------------------
def cgcn_forward(params, x, edge_index, weights, batch, num_nodes, batch_size,
                 in_channels, u, Ks):
    del batch  # every graph has exactly num_nodes contiguous, sorted nodes
    B = batch_size
    L, x_pad, packed, C, N_pad = _prepare_inputs(
        params, x, edge_index, weights, num_nodes, B, in_channels, u, Ks)

    kernel = functools.partial(_cgcn_fused_kernel, Ks=Ks)
    nodes, graph = pl.pallas_call(
        kernel,
        out_shape=(jax.ShapeDtypeStruct((B * N_pad, 1), jnp.float32),
                   jax.ShapeDtypeStruct((B, 1, 1), jnp.float32)),
        grid=(B, NUM_LAYERS),
        in_specs=[
            pl.BlockSpec((1, N_pad, N_pad), lambda b, l: (b, 0, 0)),  # L (per-graph)
            pl.BlockSpec((1, N_pad, C), lambda b, l: (b, 0, 0)),      # x (layer-0 seed)
            pl.BlockSpec((1, Ks * C, C), lambda b, l: (l, 0, 0)),     # W per layer
            pl.BlockSpec((1, 1, C), lambda b, l: (l, 0, 0)),          # bn scale
            pl.BlockSpec((1, 1, C), lambda b, l: (l, 0, 0)),          # bn shift(+b)
            pl.BlockSpec((1, C), lambda b, l: (0, 0)),                # w_node row
            pl.BlockSpec((N_pad, C), lambda b, l: (0, 0)),            # w_graph
            pl.BlockSpec(memory_space=pltpu.MemorySpace.SMEM),        # head biases
        ],
        out_specs=(pl.BlockSpec((N_pad, 1), lambda b, l: (b, 0)),     # node logits
                   pl.BlockSpec((1, 1, 1), lambda b, l: (b, 0, 0))),  # graph logit
        scratch_shapes=[pltpu.VMEM((N_pad, C), jnp.bfloat16)],        # activation
        compiler_params=pltpu.CompilerParams(
            dimension_semantics=("parallel", "arbitrary"),
            vmem_limit_bytes=_vmem_limit_bytes()),
    )(L, x_pad, packed["W_all"], packed["scale_all"], packed["shift_all"],
      packed["w_node"], packed["w_graph"], packed["head_bias"])

    logits_nodes = nodes.reshape(B, N_pad)[:, :num_nodes]
    logits_graph = graph[:, 0, 0]
    return logits_nodes, logits_graph


# --------------------------------------------------------------------------
# Pure-JAX reference mirroring the kernel math (same bf16 operand casts and
# activation truncation, f32 accumulation) == original CGCN eval forward.
# --------------------------------------------------------------------------
def cgcn_reference(params, x, edge_index, weights, num_nodes, batch_size,
                   in_channels, u, Ks):
    B = batch_size
    L, x_pad, packed, C, N_pad = _prepare_inputs(
        params, x, edge_index, weights, num_nodes, B, in_channels, u, Ks)
    h = x_pad                                               # bf16 [B, Np, C]
    h_f32 = h.astype(jnp.float32)
    for i in range(NUM_LAYERS):
        T0 = h
        txs = [T0]
        if Ks > 1:
            Tm2 = T0.astype(jnp.float32)
            T1 = jnp.einsum('bij,bjc->bic', L, T0,
                            preferred_element_type=jnp.float32)
            txs.append(T1.astype(jnp.bfloat16))
            Tm1 = T1
            for _ in range(2, Ks):
                Tk = 2.0 * jnp.einsum('bij,bjc->bic', L, txs[-1],
                                      preferred_element_type=jnp.float32) - Tm2
                txs.append(Tk.astype(jnp.bfloat16))
                Tm2, Tm1 = Tm1, Tk
        txcat = jnp.concatenate(txs, axis=-1)                # [B, Np, Ks*C]
        out = jnp.einsum('bnk,kc->bnc', txcat, packed["W_all"][i],
                         preferred_element_type=jnp.float32)
        out = out * packed["scale_all"][i] + packed["shift_all"][i]
        h_f32 = jnp.maximum(out, 0.0)
        h = h_f32.astype(jnp.bfloat16)
    nodes = (jnp.sum(h_f32 * packed["w_node"][None], axis=-1)
             + params["b_node"][0, 0])                       # [B, Np]
    graph = (jnp.sum(h_f32 * packed["w_graph"][None], axis=(1, 2))
             + params["b_graph"][0, 0])                      # [B]
    return nodes[:, :num_nodes], graph


# --------------------------------------------------------------------------
if __name__ == "__main__":
    # Small, deterministic problem: 2 graphs x 16 nodes, 4 input features,
    # u=32 hidden channels (lane-padded to 128 inside), Chebyshev order Ks=3.
    B, num_nodes, in_channels, u, Ks = 2, 16, 4, 32, 3
    n_total = B * num_nodes

    key = jax.random.PRNGKey(0)
    k_x, k_w, k_p = jax.random.split(key, 3)

    # node features
    x = jax.random.normal(k_x, (n_total, in_channels), jnp.float32)

    # ring graph inside each of the B graphs (undirected -> both directions)
    src_list, dst_list = [], []
    for g in range(B):
        base = g * num_nodes
        for n in range(num_nodes):
            a, b_ = base + n, base + (n + 1) % num_nodes
            src_list += [a, b_]
            dst_list += [b_, a]
    edge_index = jnp.array([src_list, dst_list], dtype=jnp.int32)
    n_edges = edge_index.shape[1]
    # symmetric positive edge weights
    w_half = 0.5 + jax.random.uniform(k_w, (n_edges // 2,), jnp.float32)
    weights = jnp.repeat(w_half, 2)
    batch = jnp.arange(n_total, dtype=jnp.int32) // num_nodes

    params = init_params(k_p, in_channels, u, Ks, num_nodes)

    logits_nodes, logits_graph = cgcn_forward(
        params, x, edge_index, weights, batch, num_nodes, B,
        in_channels, u, Ks)
    jax.block_until_ready((logits_nodes, logits_graph))

    ref_nodes, ref_graph = cgcn_reference(
        params, x, edge_index, weights, num_nodes, B, in_channels, u, Ks)

    assert logits_nodes.shape == (B, num_nodes)
    assert logits_graph.shape == (B,)
    assert jnp.allclose(logits_nodes, ref_nodes, rtol=1e-3, atol=1e-3)
    assert jnp.allclose(logits_graph, ref_graph, rtol=1e-3, atol=1e-3)

    print("KERNEL_OK")
</pallas_src>

<mosaic_0001>
module attributes {stable_mosaic.version = 11 : i64} {
  func.func @_cgcn_fused_kernel(%arg0: i32, %arg1: i32, %arg2: memref<1x16x16xbf16, #tpu.memory_space<vmem>>, %arg3: memref<1x16x128xbf16, #tpu.memory_space<vmem>>, %arg4: memref<1x384x128xbf16, #tpu.memory_space<vmem>>, %arg5: memref<1x1x128xf32, #tpu.memory_space<vmem>>, %arg6: memref<1x1x128xf32, #tpu.memory_space<vmem>>, %arg7: memref<1x128xf32, #tpu.memory_space<vmem>>, %arg8: memref<16x128xf32, #tpu.memory_space<vmem>>, %arg9: memref<2xf32, #tpu.memory_space<smem>>, %arg10: memref<16x1xf32, #tpu.memory_space<vmem>>, %arg11: memref<1x1x1xf32, #tpu.memory_space<vmem>>, %arg12: memref<16x128xbf16, #tpu.memory_space<vmem>>) attributes {dimension_semantics = [#tpu.dimension_semantics<parallel>, #tpu.dimension_semantics<arbitrary>], iteration_bounds = array<i64: 2, 4>, scalar_prefetch = 0 : i64, scratch_operands = 1 : i64, tpu.core_type = #tpu.core_type<tc>, window_params = [{transform_indices = @transform_0, window_bounds = array<i64: 1, 16, 16>}, {transform_indices = @transform_1, window_bounds = array<i64: 1, 16, 128>}, {transform_indices = @transform_2, window_bounds = array<i64: 1, 384, 128>}, {transform_indices = @transform_3, window_bounds = array<i64: 1, 1, 128>}, {transform_indices = @transform_4, window_bounds = array<i64: 1, 1, 128>}, {pipeline_mode = #tpu.pipeline_mode<synchronous>, transform_indices = @transform_5, window_bounds = array<i64: 1, 128>}, {pipeline_mode = #tpu.pipeline_mode<synchronous>, transform_indices = @transform_6, window_bounds = array<i64: 16, 128>}, {transform_indices = @transform_7, window_bounds = array<i64: 2>}, {transform_indices = @transform_8, window_bounds = array<i64: 16, 1>}, {transform_indices = @transform_9, window_bounds = array<i64: 1, 1, 1>}]} {
    %c0_i32 = arith.constant 0 : i32
    %0 = arith.cmpi eq, %arg1, %c0_i32 : i32
    %1 = arith.extui %0 : i1 to i32
    %c0_i32_0 = arith.constant 0 : i32
    %2 = arith.cmpi ne, %1, %c0_i32_0 : i32
    scf.if %2 {
      %c0_21 = arith.constant 0 : index
      %c0_22 = arith.constant 0 : index
      %c0_23 = arith.constant 0 : index
      %33 = vector.load %arg3[%c0_21, %c0_22, %c0_23] : memref<1x16x128xbf16, #tpu.memory_space<vmem>>, vector<1x16x128xbf16>
      %34 = vector.shape_cast %33 : vector<1x16x128xbf16> to vector<16x128xbf16>
      %c0_24 = arith.constant 0 : index
      %c0_25 = arith.constant 0 : index
      %35 = vector.load %arg12[%c0_24, %c0_25] : memref<16x128xbf16, #tpu.memory_space<vmem>>, vector<16x128xbf16>
      tpu.vector_store %arg12[%c0_24, %c0_25], %34 {strides = array<i32>} : memref<16x128xbf16, #tpu.memory_space<vmem>>, vector<16x128xbf16>,
    } else {
    }
    %c0 = arith.constant 0 : index
    %c0_1 = arith.constant 0 : index
    %c0_2 = arith.constant 0 : index
    %3 = vector.load %arg2[%c0, %c0_1, %c0_2] : memref<1x16x16xbf16, #tpu.memory_space<vmem>>, vector<1x16x16xbf16>
    %4 = vector.shape_cast %3 : vector<1x16x16xbf16> to vector<16x16xbf16>
    %c0_3 = arith.constant 0 : index
    %c0_4 = arith.constant 0 : index
    %5 = vector.load %arg12[%c0_3, %c0_4] : memref<16x128xbf16, #tpu.memory_space<vmem>>, vector<16x128xbf16>
    %6 = arith.extf %5 : vector<16x128xbf16> to vector<16x128xf32>
    %cst = arith.constant dense<0.000000e+00> : vector<16x128xf32>
    %7 = tpu.matmul %4, %5, %cst {dimension_numbers = #tpu.dot_dimension_numbers<[1], [0], [0], [1], [0, 0, 1, 1], [], []>} : vector<16x16xbf16>, vector<16x128xbf16>, vector<16x128xf32> -> vector<16x128xf32>
    %8 = arith.truncf %7 : vector<16x128xf32> to vector<16x128xbf16>
    %cst_5 = arith.constant dense<0.000000e+00> : vector<16x128xf32>
    %9 = tpu.matmul %4, %8, %cst_5 {dimension_numbers = #tpu.dot_dimension_numbers<[1], [0], [0], [1], [0, 0, 1, 1], [], []>} : vector<16x16xbf16>, vector<16x128xbf16>, vector<16x128xf32> -> vector<16x128xf32>
    %cst_6 = arith.constant 2.000000e+00 : f32
    %10 = vector.broadcast %cst_6 : f32 to vector<16x128xf32>
    %11 = arith.mulf %10, %9 : vector<16x128xf32>
    %12 = arith.subf %11, %6 : vector<16x128xf32>
    %13 = arith.truncf %12 : vector<16x128xf32> to vector<16x128xbf16>
    %14 = tpu.concatenate %5, %8, %13 in 1 : vector<16x128xbf16>, vector<16x128xbf16>, vector<16x128xbf16> -> vector<16x384xbf16>
    %c0_7 = arith.constant 0 : index
    %c0_8 = arith.constant 0 : index
    %c0_9 = arith.constant 0 : index
    %15 = vector.load %arg4[%c0_7, %c0_8, %c0_9] : memref<1x384x128xbf16, #tpu.memory_space<vmem>>, vector<1x384x128xbf16>
    %16 = vector.shape_cast %15 : vector<1x384x128xbf16> to vector<384x128xbf16>
    %cst_10 = arith.constant dense<0.000000e+00> : vector<16x128xf32>
    %17 = tpu.matmul %14, %16, %cst_10 {dimension_numbers = #tpu.dot_dimension_numbers<[1], [0], [0], [1], [0, 0, 1, 1], [], []>} : vector<16x384xbf16>, vector<384x128xbf16>, vector<16x128xf32> -> vector<16x128xf32>
    %c0_11 = arith.constant 0 : index
    %c0_12 = arith.constant 0 : index
    %c0_13 = arith.constant 0 : index
    %18 = vector.load %arg5[%c0_11, %c0_12, %c0_13] : memref<1x1x128xf32, #tpu.memory_space<vmem>>, vector<1x1x128xf32>
    %19 = vector.shape_cast %18 : vector<1x1x128xf32> to vector<1x128xf32>
    %20 = vector.broadcast %19 : vector<1x128xf32> to vector<16x128xf32>
    %21 = arith.mulf %17, %20 : vector<16x128xf32>
    %c0_14 = arith.constant 0 : index
    %c0_15 = arith.constant 0 : index
    %c0_16 = arith.constant 0 : index
    %22 = vector.load %arg6[%c0_14, %c0_15, %c0_16] : memref<1x1x128xf32, #tpu.memory_space<vmem>>, vector<1x1x128xf32>
    %23 = vector.shape_cast %22 : vector<1x1x128xf32> to vector<1x128xf32>
    %24 = vector.broadcast %23 : vector<1x128xf32> to vector<16x128xf32>
    %25 = arith.addf %21, %24 : vector<16x128xf32>
    %cst_17 = arith.constant 0.000000e+00 : f32
    %26 = vector.broadcast %cst_17 : f32 to vector<16x128xf32>
    %27 = arith.maximumf %25, %26 : vector<16x128xf32>
    %28 = arith.truncf %27 : vector<16x128xf32> to vector<16x128xbf16>
    %c0_18 = arith.constant 0 : index
    %c0_19 = arith.constant 0 : index
    %29 = vector.load %arg12[%c0_18, %c0_19] : memref<16x128xbf16, #tpu.memory_space<vmem>>, vector<16x128xbf16>
    tpu.vector_store %arg12[%c0_18, %c0_19], %28 {strides = array<i32>} : memref<16x128xbf16, #tpu.memory_space<vmem>>, vector<16x128xbf16>,
    %c3_i32 = arith.constant 3 : i32
    %30 = arith.cmpi eq, %arg1, %c3_i32 : i32
    %31 = arith.extui %30 : i1 to i32
    %c0_i32_20 = arith.constant 0 : i32
    %32 = arith.cmpi ne, %31, %c0_i32_20 : i32
    scf.if %32 {
      %c0_21 = arith.constant 0 : index
      %c0_22 = arith.constant 0 : index
      %33 = vector.load %arg7[%c0_21, %c0_22] : memref<1x128xf32, #tpu.memory_space<vmem>>, vector<1x128xf32>
      %34 = vector.broadcast %33 : vector<1x128xf32> to vector<16x128xf32>
      %35 = arith.mulf %27, %34 : vector<16x128xf32>
      %cst_23 = arith.constant dense<0.000000e+00> : vector<16xf32>
      %36 = vector.multi_reduction <add>, %35, %cst_23 [1] : vector<16x128xf32> to vector<16xf32>
      %37 = vector.shape_cast %36 : vector<16xf32> to vector<16x1xf32>
      %c0_24 = arith.constant 0 : index
      %38 = memref.load %arg9[%c0_24] : memref<2xf32, #tpu.memory_space<smem>>
      %39 = vector.broadcast %38 : f32 to vector<16x1xf32>
      %40 = arith.addf %37, %39 : vector<16x1xf32>
      %c0_25 = arith.constant 0 : index
      %c0_26 = arith.constant 0 : index
      %41 = vector.load %arg10[%c0_25, %c0_26] : memref<16x1xf32, #tpu.memory_space<vmem>>, vector<16x1xf32>
      tpu.vector_store %arg10[%c0_25, %c0_26], %40 {strides = array<i32>} : memref<16x1xf32, #tpu.memory_space<vmem>>, vector<16x1xf32>,
      %c0_27 = arith.constant 0 : index
      %c0_28 = arith.constant 0 : index
      %42 = vector.load %arg8[%c0_27, %c0_28] : memref<16x128xf32, #tpu.memory_space<vmem>>, vector<16x128xf32>
      %43 = arith.mulf %27, %42 : vector<16x128xf32>
      %cst_29 = arith.constant dense<0.000000e+00> : vector<16xf32>
      %44 = vector.multi_reduction <add>, %43, %cst_29 [1] : vector<16x128xf32> to vector<16xf32>
      %45 = vector.shape_cast %44 : vector<16xf32> to vector<16x1xf32>
      %cst_30 = arith.constant dense<0.000000e+00> : vector<1xf32>
      %46 = vector.multi_reduction <add>, %45, %cst_30 [0] : vector<16x1xf32> to vector<1xf32>
      %47 = vector.shape_cast %46 : vector<1xf32> to vector<1x1xf32>
      %c1 = arith.constant 1 : index
      %48 = memref.load %arg9[%c1] : memref<2xf32, #tpu.memory_space<smem>>
      %49 = vector.broadcast %48 : f32 to vector<1x1xf32>
      %50 = arith.addf %47, %49 : vector<1x1xf32>
      %51 = vector.shape_cast %50 : vector<1x1xf32> to vector<1x1x1xf32>
      %c0_31 = arith.constant 0 : index
      %c0_32 = arith.constant 0 : index
      %c0_33 = arith.constant 0 : index
      %52 = vector.load %arg11[%c0_31, %c0_32, %c0_33] : memref<1x1x1xf32, #tpu.memory_space<vmem>>, vector<1x1x1xf32>
      tpu.vector_store %arg11[%c0_31, %c0_32, %c0_33], %51 {strides = array<i32>} : memref<1x1x1xf32, #tpu.memory_space<vmem>>, vector<1x1x1xf32>,
    } else {
    }
    return
  }
  func.func @transform_0(%arg0: i32, %arg1: i32) -> (i32, i32, i32) {
    %c0_i32 = arith.constant 0 : i32
    %c0_i32_0 = arith.constant 0 : i32
    %c0_i32_1 = arith.constant 0 : i32
    return %arg0, %c0_i32, %c0_i32_0 : i32, i32, i32
  }
  func.func @transform_1(%arg0: i32, %arg1: i32) -> (i32, i32, i32) {
    %c0_i32 = arith.constant 0 : i32
    %c0_i32_0 = arith.constant 0 : i32
    %c0_i32_1 = arith.constant 0 : i32
    return %arg0, %c0_i32, %c0_i32_0 : i32, i32, i32
  }
  func.func @transform_2(%arg0: i32, %arg1: i32) -> (i32, i32, i32) {
    %c0_i32 = arith.constant 0 : i32
    %c0_i32_0 = arith.constant 0 : i32
    %c0_i32_1 = arith.constant 0 : i32
    return %arg1, %c0_i32, %c0_i32_0 : i32, i32, i32
  }
  func.func @transform_3(%arg0: i32, %arg1: i32) -> (i32, i32, i32) {
    %c0_i32 = arith.constant 0 : i32
    %c0_i32_0 = arith.constant 0 : i32
    %c0_i32_1 = arith.constant 0 : i32
    return %arg1, %c0_i32, %c0_i32_0 : i32, i32, i32
  }
  func.func @transform_4(%arg0: i32, %arg1: i32) -> (i32, i32, i32) {
    %c0_i32 = arith.constant 0 : i32
    %c0_i32_0 = arith.constant 0 : i32
    %c0_i32_1 = arith.constant 0 : i32
    return %arg1, %c0_i32, %c0_i32_0 : i32, i32, i32
  }
  func.func @transform_5(%arg0: i32, %arg1: i32) -> (i32, i32) {
    %c0_i32 = arith.constant 0 : i32
    %c0_i32_0 = arith.constant 0 : i32
    %c0_i32_1 = arith.constant 0 : i32
    return %c0_i32, %c0_i32_0 : i32, i32
  }
  func.func @transform_6(%arg0: i32, %arg1: i32) -> (i32, i32) {
    %c0_i32 = arith.constant 0 : i32
    %c0_i32_0 = arith.constant 0 : i32
    %c0_i32_1 = arith.constant 0 : i32
    return %c0_i32, %c0_i32_0 : i32, i32
  }
  func.func @transform_7(%arg0: i32, %arg1: i32) -> i32 {
    %c0_i32 = arith.constant 0 : i32
    %c0_i32_0 = arith.constant 0 : i32
    return %c0_i32 : i32
  }
  func.func @transform_8(%arg0: i32, %arg1: i32) -> (i32, i32) {
    %c0_i32 = arith.constant 0 : i32
    %c0_i32_0 = arith.constant 0 : i32
    return %arg0, %c0_i32 : i32, i32
  }
  func.func @transform_9(%arg0: i32, %arg1: i32) -> (i32, i32, i32) {
    %c0_i32 = arith.constant 0 : i32
    %c0_i32_0 = arith.constant 0 : i32
    %c0_i32_1 = arith.constant 0 : i32
    return %arg0, %c0_i32, %c0_i32_0 : i32, i32, i32
  }
}

</mosaic_0001>

<llo_original>
// kernel: tpu_custom_call.1
$region0: #{tpu_custom_call.1}
  #allocation0 [shape = 'u32[]', space=smem, size = 0x4, offset = 0x4, fixed_abs, tag = 'smem constant byte address 0x4 - core index']
  #allocation1 [shape = 'u32[72,128]{1,0:T(1,128)}', space=vmem, size = 0x9000, scoped, tag = 'internal scratch']
  #allocation2 [shape = 'bf16[16,128]{1,0:T(8,128)(2,1)}', space=vmem, size = 0x1000, scoped, tag = 'scratch operand']
  %s0 = inlined_call_operand.hbm [shape: bf16[2,16,16], index: 0, kind: input, shape index: {}]
  %s1 = inlined_call_operand.hbm [shape: bf16[2,16,128], index: 1, kind: input, shape index: {}]
  %s2 = inlined_call_operand.hbm [shape: bf16[4,384,128], index: 2, kind: input, shape index: {}]
  %s3 = inlined_call_operand.hbm [shape: f32[4,1,128], index: 3, kind: input, shape index: {}]
  %s4 = inlined_call_operand.hbm [shape: f32[4,1,128], index: 4, kind: input, shape index: {}]
  %s5 = inlined_call_operand.vmem [shape: f32[1,128], index: 5, kind: input, shape index: {}]
  %s6 = inlined_call_operand.hbm [shape: f32[16,128], index: 6, kind: input, shape index: {}]
  %s7 = inlined_call_operand.vmem [shape: f32[2], index: 7, kind: input, shape index: {}]
  %s8 = inlined_call_operand.vmem [shape: f32[32,1], index: 8, kind: output, shape index: {0}]
  %s9 = inlined_call_operand.vmem [shape: f32[2,1,1], index: 9, kind: output, shape index: {1}]
  %10 = xla_tuple %s8, %s9
  %s11 = sld [smem:[#allocation0]]
  $region109: #{tpu_custom_call.1} parent=0
    _
  %s13 = ssub.s32 1, %s11
  %s14 = scalar_select 0, %s13, %s11
  $region1: #{tpu_custom_call.1} parent=0
    #allocation3 [shape = 'u8[8192]{0}', space=vmem, size = 0x2000, scoped, tag = 'input window, operand 0']
    #allocation4 [shape = 's32[2]{0}', space=sflag, size = 0x8, scoped, tag = 'scoped memory for tpu_custom_call.1']
    #allocation5 [shape = 's32[2]{0}', space=sflag, size = 0x8, scoped, tag = 'scoped memory for tpu_custom_call.1']
    #allocation6 [shape = 'u8[8192]{0}', space=vmem, size = 0x2000, scoped, tag = 'input window, operand 1']
    #allocation7 [shape = 's32[2]{0}', space=sflag, size = 0x8, scoped, tag = 'scoped memory for tpu_custom_call.1']
    #allocation8 [shape = 'u8[196608]{0}', space=vmem, size = 0x30000, scoped, tag = 'input window, operand 2']
    #allocation9 [shape = 'u8[1024]{0}', space=vmem, size = 0x400, scoped, tag = 'input window, operand 3']
    #allocation10 [shape = 's32[2]{0}', space=sflag, size = 0x8, scoped, tag = 'scoped memory for tpu_custom_call.1']
    #allocation11 [shape = 'u8[1024]{0}', space=vmem, size = 0x400, scoped, tag = 'input window, operand 4']
    #allocation12 [shape = 'u8[8192]{0}', space=vmem, size = 0x2000, scoped, tag = 'input window, operand 6, single buffered']
    #allocation13 [shape = 's32[1]{0}', space=sflag, size = 0x4, scoped, tag = 'scoped memory for tpu_custom_call.1']
    #allocation14 [shape = 'u8[512]{0}', space=smem, size = 0x200, scoped, tag = 'input window, operand 7, single buffered']
    %15 = vsyncpa [#allocation4], 0
    %s16 = scalar_lea.sflag [#allocation4], 1
    %17 = vsyncpa %s16, 0
    %18 = vsyncpa [#allocation7], 0
    %s19 = scalar_lea.sflag [#allocation7], 1
    %20 = vsyncpa %s19, 0
    %21 = vsyncpa [#allocation10], 0
    %s22 = scalar_lea.sflag [#allocation10], 1
    %23 = vsyncpa %s22, 0
    %24 = vsyncpa [#allocation13], 0
    %25 = vsyncpa [#allocation5], 0
    loop: start=0, step=1, limit=10
    $region2: #{tpu_custom_call.1} parent=1 // loop_pre_header
      _
    $region3: #{tpu_custom_call.1} parent=1 // loop_header
      %s27 = sphi 0, %s31
      %p28 = scmp.ge.s32.totalorder %s27, 10
      %s34 = sphi 0, %s46
      %s35 = sphi 0, %s42
      %s36 = sphi 0, %s34
      %s37 = sphi 0, %s35
      %s38 = sphi 0, %s36
      %s39 = sphi 0, %s37
      %s49 = sphi 0, %s51
      %s52 = sphi 0, %s49
      %s53 = sphi 0, %s52
      %s69 = sphi 0, %s53
      %s75 = sphi 0, %s77
      %s78 = sphi 0, %s75
      %s79 = sphi 0, %s78
      %s95 = sphi 0, %s79
      %s101 = sphi 0, %s103
      %s104 = sphi 0, %s101
      %s105 = sphi 0, %s104
      %s121 = sphi 0, %s105
      %s127 = sphi 0, %s129
      %s130 = sphi 0, %s127
      %s131 = sphi 0, %s130
      %s147 = sphi 0, %s131
      %s153 = sphi 0, %s155
      %s156 = sphi 0, %s153
      %s157 = sphi 0, %s156
      %s173 = sphi 0, %s157
      %s177 = sphi 0, %s177
      %s179 = sphi 0, %s177
      %s180 = sphi 0, %s179
      %s194 = sphi 0, %s180
      %s198 = sphi 0, %s198
      %s200 = sphi 0, %s198
      %s201 = sphi 0, %s200
      %s215 = sphi 0, %s201
      %s219 = sphi 0, %s219
      %s221 = sphi 0, %s219
      %s222 = sphi 0, %s221
      %s236 = sphi 0, %s222
      %s242 = sphi 0, %s244
      %s245 = sphi 0, %s242
      %s246 = sphi 0, %s245
      %s262 = sphi 0, %s246
      %s268 = sphi 0, %s270
      %s271 = sphi 0, %s268
      %s272 = sphi 0, %s271
      %s288 = sphi 0, %s272
    $region4: #{tpu_custom_call.1} parent=1 // loop_header_branch
      %30 = sbr.rel (%p28) target = $region8
    $region5: #{tpu_custom_call.1} parent=1 // loop_body
      %s32 = ssub.s32 %s27, 1
      %s33 = ssub.s32 %s27, 2
      %s40 = sadd.s32 1, %s35
      %p41 = scmp.ge.s32.totalorder %s40, 4
      %s42 = scalar_select %p41, 0, %s40
      %s43 = sadd.s32 1, %s34
      %s44 = scalar_select %p41, %s43, %s34
      %p45 = scmp.ge.s32.totalorder %s44, 2
      %s46 = scalar_select %p45, 0, %s44
      %s47 = ssub.s32 %s34, %s46
      %p48 = scmp.eq.s32.totalorder %s47, 0
      %s50 = sadd.s32 %s49, 1
      %s51 = scalar_select %p48, %s49, %s50
      %p54 = pneg %p48
      %p55 = scmp.eq.s32.totalorder %s27, 7
      %p56 = por %p54, %p55
      %p57 = scmp.ne.s32.totalorder %s49, %s52
      %p58 = scmp.eq.s32.totalorder %s27, 0
      %p59 = por %p57, %p58
      %p60 = scmp.ne.s32.totalorder %s49, %s52
      %p61 = scmp.eq.s32.totalorder %s32, 7
      %p62 = por %p60, %p61
      %p63 = scmp.ne.s32.totalorder %s52, %s53
      %p64 = scmp.eq.s32.totalorder %s32, 0
      %p65 = por %p63, %p64
      %p66 = scmp.ne.s32.totalorder %s52, %s53
      %p67 = scmp.eq.s32.totalorder %s33, 7
      %p68 = por %p66, %p67
      %p70 = scmp.ne.s32.totalorder %s53, %s69
      %p71 = scmp.eq.s32.totalorder %s33, 0
      %p72 = por %p70, %p71
      %s73 = ssub.s32 %s34, %s46
      %p74 = scmp.eq.s32.totalorder %s73, 0
      %s76 = sadd.s32 %s75, 1
      %s77 = scalar_select %p74, %s75, %s76
      %p80 = pneg %p74
      %p81 = scmp.eq.s32.totalorder %s27, 7
      %p82 = por %p80, %p81
      %p83 = scmp.ne.s32.totalorder %s75, %s78
      %p84 = scmp.eq.s32.totalorder %s27, 0
      %p85 = por %p83, %p84
      %p86 = scmp.ne.s32.totalorder %s75, %s78
      %p87 = scmp.eq.s32.totalorder %s32, 7
      %p88 = por %p86, %p87
      %p89 = scmp.ne.s32.totalorder %s78, %s79
      %p90 = scmp.eq.s32.totalorder %s32, 0
      %p91 = por %p89, %p90
      %p92 = scmp.ne.s32.totalorder %s78, %s79
      %p93 = scmp.eq.s32.totalorder %s33, 7
      %p94 = por %p92, %p93
      %p96 = scmp.ne.s32.totalorder %s79, %s95
      %p97 = scmp.eq.s32.totalorder %s33, 0
      %p98 = por %p96, %p97
      %s99 = ssub.s32 %s35, %s42
      %p100 = scmp.eq.s32.totalorder %s99, 0
      %s102 = sadd.s32 %s101, 1
      %s103 = scalar_select %p100, %s101, %s102
      %p106 = pneg %p100
      %p107 = scmp.eq.s32.totalorder %s27, 7
      %p108 = por %p106, %p107
      %p109 = scmp.ne.s32.totalorder %s101, %s104
      %p110 = scmp.eq.s32.totalorder %s27, 0
      %p111 = por %p109, %p110
      %p112 = scmp.ne.s32.totalorder %s101, %s104
      %p113 = scmp.eq.s32.totalorder %s32, 7
      %p114 = por %p112, %p113
      %p115 = scmp.ne.s32.totalorder %s104, %s105
      %p116 = scmp.eq.s32.totalorder %s32, 0
      %p117 = por %p115, %p116
      %p118 = scmp.ne.s32.totalorder %s104, %s105
      %p119 = scmp.eq.s32.totalorder %s33, 7
      %p120 = por %p118, %p119
      %p122 = scmp.ne.s32.totalorder %s105, %s121
      %p123 = scmp.eq.s32.totalorder %s33, 0
      %p124 = por %p122, %p123
      %s125 = ssub.s32 %s35, %s42
      %p126 = scmp.eq.s32.totalorder %s125, 0
      %s128 = sadd.s32 %s127, 1
      %s129 = scalar_select %p126, %s127, %s128
      %p132 = pneg %p126
      %p133 = scmp.eq.s32.totalorder %s27, 7
      %p134 = por %p132, %p133
      %p135 = scmp.ne.s32.totalorder %s127, %s130
      %p136 = scmp.eq.s32.totalorder %s27, 0
      %p137 = por %p135, %p136
      %p138 = scmp.ne.s32.totalorder %s127, %s130
      %p139 = scmp.eq.s32.totalorder %s32, 7
      %p140 = por %p138, %p139
      %p141 = scmp.ne.s32.totalorder %s130, %s131
      %p142 = scmp.eq.s32.totalorder %s32, 0
      %p143 = por %p141, %p142
      %p144 = scmp.ne.s32.totalorder %s130, %s131
      %p145 = scmp.eq.s32.totalorder %s33, 7
      %p146 = por %p144, %p145
      %p148 = scmp.ne.s32.totalorder %s131, %s147
      %p149 = scmp.eq.s32.totalorder %s33, 0
      %p150 = por %p148, %p149
      %s151 = ssub.s32 %s35, %s42
      %p152 = scmp.eq.s32.totalorder %s151, 0
      %s154 = sadd.s32 %s153, 1
      %s155 = scalar_select %p152, %s153, %s154
      %p158 = pneg %p152
      %p159 = scmp.eq.s32.totalorder %s27, 7
      %p160 = por %p158, %p159
      %p161 = scmp.ne.s32.totalorder %s153, %s156
      %p162 = scmp.eq.s32.totalorder %s27, 0
      %p163 = por %p161, %p162
      %p164 = scmp.ne.s32.totalorder %s153, %s156
      %p165 = scmp.eq.s32.totalorder %s32, 7
      %p166 = por %p164, %p165
      %p167 = scmp.ne.s32.totalorder %s156, %s157
      %p168 = scmp.eq.s32.totalorder %s32, 0
      %p169 = por %p167, %p168
      %p170 = scmp.ne.s32.totalorder %s156, %s157
      %p171 = scmp.eq.s32.totalorder %s33, 7
      %p172 = por %p170, %p171
      %p174 = scmp.ne.s32.totalorder %s157, %s173
      %p175 = scmp.eq.s32.totalorder %s33, 0
      %p176 = por %p174, %p175
      %s178 = sadd.s32 %s177, 1
      %p181 = scmp.eq.s32.totalorder %s27, 7
      %p182 = scmp.ne.s32.totalorder %s177, %s179
      %p183 = scmp.eq.s32.totalorder %s27, 0
      %p184 = por %p182, %p183
      %p185 = scmp.ne.s32.totalorder %s177, %s179
      %p186 = scmp.eq.s32.totalorder %s32, 7
      %p187 = por %p185, %p186
      %p188 = scmp.ne.s32.totalorder %s179, %s180
      %p189 = scmp.eq.s32.totalorder %s32, 0
      %p190 = por %p188, %p189
      %p191 = scmp.ne.s32.totalorder %s179, %s180
      %p192 = scmp.eq.s32.totalorder %s33, 7
      %p193 = por %p191, %p192
      %p195 = scmp.ne.s32.totalorder %s180, %s194
      %p196 = scmp.eq.s32.totalorder %s33, 0
      %p197 = por %p195, %p196
      %s199 = sadd.s32 %s198, 1
      %p202 = scmp.eq.s32.totalorder %s27, 7
      %p203 = scmp.ne.s32.totalorder %s198, %s200
      %p204 = scmp.eq.s32.totalorder %s27, 0
      %p205 = por %p203, %p204
      %p206 = scmp.ne.s32.totalorder %s198, %s200
      %p207 = scmp.eq.s32.totalorder %s32, 7
      %p208 = por %p206, %p207
      %p209 = scmp.ne.s32.totalorder %s200, %s201
      %p210 = scmp.eq.s32.totalorder %s32, 0
      %p211 = por %p209, %p210
      %p212 = scmp.ne.s32.totalorder %s200, %s201
      %p213 = scmp.eq.s32.totalorder %s33, 7
      %p214 = por %p212, %p213
      %p216 = scmp.ne.s32.totalorder %s201, %s215
      %p217 = scmp.eq.s32.totalorder %s33, 0
      %p218 = por %p216, %p217
      %s220 = sadd.s32 %s219, 1
      %p223 = scmp.eq.s32.totalorder %s27, 7
      %p224 = scmp.ne.s32.totalorder %s219, %s221
      %p225 = scmp.eq.s32.totalorder %s27, 0
      %p226 = por %p224, %p225
      %p227 = scmp.ne.s32.totalorder %s219, %s221
      %p228 = scmp.eq.s32.totalorder %s32, 7
      %p229 = por %p227, %p228
      %p230 = scmp.ne.s32.totalorder %s221, %s222
      %p231 = scmp.eq.s32.totalorder %s32, 0
      %p232 = por %p230, %p231
      %p233 = scmp.ne.s32.totalorder %s221, %s222
      %p234 = scmp.eq.s32.totalorder %s33, 7
      %p235 = por %p233, %p234
      %p237 = scmp.ne.s32.totalorder %s222, %s236
      %p238 = scmp.eq.s32.totalorder %s33, 0
      %p239 = por %p237, %p238
      %s240 = ssub.s32 %s34, %s46
      %p241 = scmp.eq.s32.totalorder %s240, 0
      %s243 = sadd.s32 %s242, 1
      %s244 = scalar_select %p241, %s242, %s243
      %p247 = pneg %p241
      %p248 = scmp.eq.s32.totalorder %s27, 7
      %p249 = por %p247, %p248
      %p250 = scmp.ne.s32.totalorder %s242, %s245
      %p251 = scmp.eq.s32.totalorder %s27, 0
      %p252 = por %p250, %p251
      %p253 = scmp.ne.s32.totalorder %s242, %s245
      %p254 = scmp.eq.s32.totalorder %s32, 7
      %p255 = por %p253, %p254
      %p256 = scmp.ne.s32.totalorder %s245, %s246
      %p257 = scmp.eq.s32.totalorder %s32, 0
      %p258 = por %p256, %p257
      %p259 = scmp.ne.s32.totalorder %s245, %s246
      %p260 = scmp.eq.s32.totalorder %s33, 7
      %p261 = por %p259, %p260
      %p263 = scmp.ne.s32.totalorder %s246, %s262
      %p264 = scmp.eq.s32.totalorder %s33, 0
      %p265 = por %p263, %p264
      %s266 = ssub.s32 %s34, %s46
      %p267 = scmp.eq.s32.totalorder %s266, 0
      %s269 = sadd.s32 %s268, 1
      %s270 = scalar_select %p267, %s268, %s269
      %p273 = pneg %p267
      %p274 = scmp.eq.s32.totalorder %s27, 7
      %p275 = por %p273, %p274
      %p276 = scmp.ne.s32.totalorder %s268, %s271
      %p277 = scmp.eq.s32.totalorder %s27, 0
      %p278 = por %p276, %p277
      %p279 = scmp.ne.s32.totalorder %s268, %s271
      %p280 = scmp.eq.s32.totalorder %s32, 7
      %p281 = por %p279, %p280
      %p282 = scmp.ne.s32.totalorder %s271, %s272
      %p283 = scmp.eq.s32.totalorder %s32, 0
      %p284 = por %p282, %p283
      %p285 = scmp.ne.s32.totalorder %s271, %s272
      %p286 = scmp.eq.s32.totalorder %s33, 7
      %p287 = por %p285, %p286
      %p289 = scmp.ne.s32.totalorder %s272, %s288
      %p290 = scmp.eq.s32.totalorder %s33, 0
      %p291 = por %p289, %p290
      %p292 = scmp.le.s32.totalorder 1, %s27
      %p293 = scmp.lt.s32.totalorder %s27, 9
      %p294 = pnand %p292, %p293
      %p295 = pneg %p294
      // Predicated region
      $region9: #{tpu_custom_call.1} parent=5 // pred_check
        _
      $region10: #{tpu_custom_call.1} parent=5 // pred_check_branch
        %297 = sbr.rel (%p294) target = $region12
      $region11: #{tpu_custom_call.1} parent=5 // pred_region
        %s298 = ssub.s32 %s27, 1
        // Predicated region
        $region13: #{tpu_custom_call.1} parent=11 // pred_check
          %p299 = pneg %p190
        $region14: #{tpu_custom_call.1} parent=11 // pred_check_branch
          %301 = sbr.rel (%p299) target = $region16
        $region15: #{tpu_custom_call.1} parent=11 // pred_region
          _
        $region16: #{tpu_custom_call.1} parent=11 // pred_fallthru
          _
        // Predicated region
        $region17: #{tpu_custom_call.1} parent=11 // pred_check
          %p302 = pneg %p211
        $region18: #{tpu_custom_call.1} parent=11 // pred_check_branch
          %304 = sbr.rel (%p302) target = $region20
        $region19: #{tpu_custom_call.1} parent=11 // pred_region
          %306 = vsyncadd [#allocation13], 0
          %s307 = sshll.u32 %s6, 4
          %s308 = int_to_ptr.hbm [resolvable:$true] %s307
          %s309 = sshll.u32 [#allocation12], 4
          %s310 = int_to_ptr.vmem [resolvable:$true] %s309
          %315 = dma.hbm_to_vmem [thread:$0]  %s308, 256, %s310, [#allocation13], 128, 128, 8
        $region20: #{tpu_custom_call.1} parent=11 // pred_fallthru
          _
        // Predicated region
        $region21: #{tpu_custom_call.1} parent=11 // pred_check
          %p316 = pneg %p232
        $region22: #{tpu_custom_call.1} parent=11 // pred_check_branch
          %318 = sbr.rel (%p316) target = $region24
        $region23: #{tpu_custom_call.1} parent=11 // pred_region
          %320 = vsyncadd [#allocation5], 0
          %s322 = sshll.u32 %s7, 4
          %s323 = int_to_ptr.vmem [resolvable:$true] %s322
          %325 = dma.vmem_to_smem %s323, 16, [#allocation14], [#allocation5]
        $region24: #{tpu_custom_call.1} parent=11 // pred_fallthru
          _
      $region12: #{tpu_custom_call.1} parent=5 // pred_fallthru
        _
      %p326 = scmp.lt.s32.totalorder %s27, 8
      // Predicated region
      $region25: #{tpu_custom_call.1} parent=5 // pred_check
        %p327 = pneg %p326
      $region26: #{tpu_custom_call.1} parent=5 // pred_check_branch
        %329 = sbr.rel (%p327) target = $region28
      $region27: #{tpu_custom_call.1} parent=5 // pred_region
        // Predicated region
        $region29: #{tpu_custom_call.1} parent=27 // pred_check
          %p330 = pneg %p59
        $region30: #{tpu_custom_call.1} parent=27 // pred_check_branch
          %332 = sbr.rel (%p330) target = $region32
        $region31: #{tpu_custom_call.1} parent=27 // pred_region
          %s333 = sand.u32 %s49, 1
          %s334 = scalar_lea.sflag [#allocation4], %s333
          %s335 = sand.u32 %s49, 1
          %s336 = smul.addr %s335, 8
          %s337 = scalar_lea.vmem [#allocation3], %s336
          %339 = vsyncadd %s334, 0
          %s340 = smul.addr %s34, 2
          %s341 = smul.addr %s340, 4
          %s342 = scalar_lea.hbm %s0, %s341
          %s343 = sshll.u32 %s342, 4
          %s344 = int_to_ptr.hbm [resolvable:$true] %s343
          %s345 = sshll.u32 %s337, 4
          %s346 = int_to_ptr.vmem [resolvable:$true] %s345
          %351 = dma.hbm_to_vmem [thread:$0]  %s344, 128, %s346, %s334, 64, 64, 4
        $region32: #{tpu_custom_call.1} parent=27 // pred_fallthru
          _
        // Predicated region
        $region33: #{tpu_custom_call.1} parent=27 // pred_check
          %p352 = pneg %p85
        $region34: #{tpu_custom_call.1} parent=27 // pred_check_branch
          %354 = sbr.rel (%p352) target = $region36
        $region35: #{tpu_custom_call.1} parent=27 // pred_region
          %s355 = sand.u32 %s27, 1
          %s356 = scalar_lea.sflag [#allocation7], %s355
          %s357 = sand.u32 %s75, 1
          %s358 = smul.addr %s357, 8
          %s359 = scalar_lea.vmem [#allocation6], %s358
          %361 = vsyncadd %s356, 0
          %s362 = smul.addr %s34, 2
          %s363 = smul.addr %s362, 4
          %s364 = scalar_lea.hbm %s1, %s363
          %s365 = sshll.u32 %s364, 4
          %s366 = int_to_ptr.hbm [resolvable:$true] %s365
          %s367 = sshll.u32 %s359, 4
          %s368 = int_to_ptr.vmem [resolvable:$true] %s367
          %373 = dma.hbm_to_vmem [thread:$0]  %s366, 128, %s368, %s356, 64, 64, 4
        $region36: #{tpu_custom_call.1} parent=27 // pred_fallthru
          _
        // Predicated region
        $region37: #{tpu_custom_call.1} parent=27 // pred_check
          %p374 = pneg %p111
        $region38: #{tpu_custom_call.1} parent=27 // pred_check_branch
          %376 = sbr.rel (%p374) target = $region40
        $region39: #{tpu_custom_call.1} parent=27 // pred_region
          %s377 = sand.u32 %s27, 1
          %s378 = scalar_lea.sflag [#allocation7], %s377
          %s379 = sand.u32 %s101, 1
          %s380 = smul.addr %s379, 192
          %s381 = scalar_lea.vmem [#allocation8], %s380
          %383 = vsyncadd %s378, 0
          %s384 = smul.addr %s35, 48
          %s385 = smul.addr %s384, 4
          %s386 = scalar_lea.hbm %s2, %s385
          %s387 = sshll.u32 %s386, 4
          %s388 = int_to_ptr.hbm [resolvable:$true] %s387
          %s389 = sshll.u32 %s381, 4
          %s390 = int_to_ptr.vmem [resolvable:$true] %s389
          %395 = dma.hbm_to_vmem [thread:$0]  %s388, 3072, %s390, %s378, 64, 64, 4
        $region40: #{tpu_custom_call.1} parent=27 // pred_fallthru
          _
        // Predicated region
        $region41: #{tpu_custom_call.1} parent=27 // pred_check
          %p396 = pneg %p137
        $region42: #{tpu_custom_call.1} parent=27 // pred_check_branch
          %398 = sbr.rel (%p396) target = $region44
        $region43: #{tpu_custom_call.1} parent=27 // pred_region
          %s399 = sand.u32 %s27, 1
          %s400 = scalar_lea.sflag [#allocation10], %s399
          %s401 = sand.u32 %s127, 1
          %s402 = scalar_lea.vmem [#allocation9], %s401
          %404 = vsyncadd %s400, 0
          %s405 = scalar_lea.hbm %s3, %s35
          %s407 = sshll.u32 %s405, 4
          %s408 = int_to_ptr.hbm [resolvable:$true] %s407
          %s409 = sshll.u32 %s402, 4
          %s410 = int_to_ptr.vmem [resolvable:$true] %s409
          %412 = dma.hbm_to_vmem [thread:$0]  %s408, 16, %s410, %s400
        $region44: #{tpu_custom_call.1} parent=27 // pred_fallthru
          _
        // Predicated region
        $region45: #{tpu_custom_call.1} parent=27 // pred_check
          %p413 = pneg %p163
        $region46: #{tpu_custom_call.1} parent=27 // pred_check_branch
          %415 = sbr.rel (%p413) target = $region48
        $region47: #{tpu_custom_call.1} parent=27 // pred_region
          %s416 = sand.u32 %s27, 1
          %s417 = scalar_lea.sflag [#allocation10], %s416
          %s418 = sand.u32 %s153, 1
          %s419 = scalar_lea.vmem [#allocation11], %s418
          %421 = vsyncadd %s417, 0
          %s422 = scalar_lea.hbm %s4, %s35
          %s424 = sshll.u32 %s422, 4
          %s425 = int_to_ptr.hbm [resolvable:$true] %s424
          %s426 = sshll.u32 %s419, 4
          %s427 = int_to_ptr.vmem [resolvable:$true] %s426
          %429 = dma.hbm_to_vmem [thread:$0]  %s425, 16, %s427, %s417
        $region48: #{tpu_custom_call.1} parent=27 // pred_fallthru
          _
      $region28: #{tpu_custom_call.1} parent=5 // pred_fallthru
        _
      %p430 = scmp.le.s32.totalorder 1, %s27
      %p431 = scmp.lt.s32.totalorder %s27, 9
      %p432 = pnand %p430, %p431
      %p433 = pneg %p432
      // Predicated region
      $region49: #{tpu_custom_call.1} parent=5 // pred_check
        _
      $region50: #{tpu_custom_call.1} parent=5 // pred_check_branch
        %435 = sbr.rel (%p432) target = $region52
      $region51: #{tpu_custom_call.1} parent=5 // pred_region
        %s436 = ssub.s32 %s27, 1
        %s437 = sand.u32 %s52, 1
        %s438 = scalar_lea.sflag [#allocation4], %s437
        %s439 = sand.u32 %s52, 1
        %s440 = smul.addr %s439, 8
        %s441 = scalar_lea.vmem [#allocation3], %s440
        // Predicated region
        $region53: #{tpu_custom_call.1} parent=51 // pred_check
          %p442 = pneg %p65
        $region54: #{tpu_custom_call.1} parent=51 // pred_check_branch
          %444 = sbr.rel (%p442) target = $region56
        $region55: #{tpu_custom_call.1} parent=51 // pred_region
          %446 = dma.done %s438, 128
        $region56: #{tpu_custom_call.1} parent=51 // pred_fallthru
          _
        %s447 = sand.u32 %s32, 1
        %s448 = scalar_lea.sflag [#allocation7], %s447
        %s449 = sand.u32 %s78, 1
        %s450 = smul.addr %s449, 8
        %s451 = scalar_lea.vmem [#allocation6], %s450
        // Predicated region
        $region57: #{tpu_custom_call.1} parent=51 // pred_check
          %p452 = pneg %p91
        $region58: #{tpu_custom_call.1} parent=51 // pred_check_branch
          %454 = sbr.rel (%p452) target = $region60
        $region59: #{tpu_custom_call.1} parent=51 // pred_region
          %456 = dma.done %s448, 128
        $region60: #{tpu_custom_call.1} parent=51 // pred_fallthru
          _
        %s457 = sand.u32 %s32, 1
        %s458 = scalar_lea.sflag [#allocation7], %s457
        %s459 = sand.u32 %s104, 1
        %s460 = smul.addr %s459, 192
        %s461 = scalar_lea.vmem [#allocation8], %s460
        // Predicated region
        $region61: #{tpu_custom_call.1} parent=51 // pred_check
          %p462 = pneg %p117
        $region62: #{tpu_custom_call.1} parent=51 // pred_check_branch
          %464 = sbr.rel (%p462) target = $region64
        $region63: #{tpu_custom_call.1} parent=51 // pred_region
          %466 = dma.done %s458, 3072
        $region64: #{tpu_custom_call.1} parent=51 // pred_fallthru
          _
        %s467 = sand.u32 %s32, 1
        %s468 = scalar_lea.sflag [#allocation10], %s467
        %s469 = sand.u32 %s130, 1
        %s470 = scalar_lea.vmem [#allocation9], %s469
        // Predicated region
        $region65: #{tpu_custom_call.1} parent=51 // pred_check
          %p471 = pneg %p143
        $region66: #{tpu_custom_call.1} parent=51 // pred_check_branch
          %473 = sbr.rel (%p471) target = $region68
        $region67: #{tpu_custom_call.1} parent=51 // pred_region
          %475 = dma.done %s468, 16
        $region68: #{tpu_custom_call.1} parent=51 // pred_fallthru
          _
        %s476 = sand.u32 %s32, 1
        %s477 = scalar_lea.sflag [#allocation10], %s476
        %s478 = sand.u32 %s156, 1
        %s479 = scalar_lea.vmem [#allocation11], %s478
        // Predicated region
        $region69: #{tpu_custom_call.1} parent=51 // pred_check
          %p480 = pneg %p169
        $region70: #{tpu_custom_call.1} parent=51 // pred_check_branch
          %482 = sbr.rel (%p480) target = $region72
        $region71: #{tpu_custom_call.1} parent=51 // pred_region
          %484 = dma.done %s477, 16
        $region72: #{tpu_custom_call.1} parent=51 // pred_fallthru
          _
        // Predicated region
        $region73: #{tpu_custom_call.1} parent=51 // pred_check
          %p485 = pneg %p211
        $region74: #{tpu_custom_call.1} parent=51 // pred_check_branch
          %487 = sbr.rel (%p485) target = $region76
        $region75: #{tpu_custom_call.1} parent=51 // pred_region
          %489 = dma.done [#allocation13], 256
        $region76: #{tpu_custom_call.1} parent=51 // pred_fallthru
          _
        // Predicated region
        $region77: #{tpu_custom_call.1} parent=51 // pred_check
          %p490 = pneg %p232
        $region78: #{tpu_custom_call.1} parent=51 // pred_check_branch
          %492 = sbr.rel (%p490) target = $region80
        $region79: #{tpu_custom_call.1} parent=51 // pred_region
          %494 = dma.done [#allocation5], 16
        $region80: #{tpu_custom_call.1} parent=51 // pred_fallthru
          _
        %495 = sfence
        %s496 = sand.u32 %s52, 1
        %s497 = scalar_lea.sflag [#allocation4], %s496
        %s498 = sand.u32 %s52, 1
        %s499 = smul.addr %s498, 8
        %s500 = scalar_lea.vmem [#allocation3], %s499
        %p501 = pneg %p65
        %p502 = pneg %p62
        %s503 = sand.u32 %s32, 1
        %s504 = scalar_lea.sflag [#allocation7], %s503
        %s505 = sand.u32 %s78, 1
        %s506 = smul.addr %s505, 8
        %s507 = scalar_lea.vmem [#allocation6], %s506
        %p508 = pneg %p91
        %p509 = pneg %p88
        %s510 = sand.u32 %s32, 1
        %s511 = scalar_lea.sflag [#allocation7], %s510
        %s512 = sand.u32 %s104, 1
        %s513 = smul.addr %s512, 192
        %s514 = scalar_lea.vmem [#allocation8], %s513
        %p515 = pneg %p117
        %p516 = pneg %p114
        %s517 = sand.u32 %s32, 1
        %s518 = scalar_lea.sflag [#allocation10], %s517
        %s519 = sand.u32 %s130, 1
        %s520 = scalar_lea.vmem [#allocation9], %s519
        %p521 = pneg %p143
        %p522 = pneg %p140
        %s523 = sand.u32 %s32, 1
        %s524 = scalar_lea.sflag [#allocation10], %s523
        %s525 = sand.u32 %s156, 1
        %s526 = scalar_lea.vmem [#allocation11], %s525
        %p527 = pneg %p169
        %p528 = pneg %p166
        %p529 = pneg %p190
        %p530 = pneg %p187
        %p531 = pneg %p211
        %p532 = pneg %p208
        %p533 = pneg %p232
        %p534 = pneg %p229
        %p535 = pneg %p258
        %p536 = pneg %p255
        %s537 = smul.u32 2, %s36
        %p538 = scmp.lt.s32.totalorder %s537, 3
        %s539 = scalar_select %p538, %s537, 3
        %s540 = smul.addr %s539, 8
        %s541 = scalar_lea.vmem %s8, %s540
        %p542 = pneg %p284
        %p543 = pneg %p281
        %p544 = scmp.lt.s32.totalorder %s36, 1
        %s545 = scalar_select %p544, %s36, 1
        %s546 = scalar_lea.vmem %s9, %s545
        %s547 = smul.u32 2, %s36
        %p548 = scmp.lt.s32.totalorder %s547, 3
        %s549 = scalar_select %p548, %s547, 3
        %s550 = smul.addr %s549, 8
        %s551 = scalar_lea.vmem %s8, %s550
        %s552 = smul.u32 2, %s36
        %p553 = scmp.lt.s32.totalorder %s36, 1
        %s554 = scalar_select %p553, %s36, 1
        %s555 = scalar_lea.vmem %s9, %s554
        %p557 = scmp.eq.s32.totalorder %s37, 0
        // Predicated region
        $region81: #{tpu_custom_call.1} parent=51 // pred_check
          %p558 = pneg %p557
        $region82: #{tpu_custom_call.1} parent=51 // pred_check_branch
          %560 = sbr.rel (%p558) target = $region84
        $region83: #{tpu_custom_call.1} parent=51 // pred_region
          %v561 = vld [vmem:[%s451] sm:$0xf]
          %v562 = vld [vmem:[%s451 + $0x4] sm:$0xf]
          %563 = vst [vmem:[#allocation2] sm:$0xf] %v561
          %564 = vst [vmem:[#allocation2 + $0x4] sm:$0xf] %v562
        $region84: #{tpu_custom_call.1} parent=51 // pred_fallthru
          _
        %v565 = vld [vmem:[%s441] sm:$0xf]
        %v566 = vld [vmem:[%s441 + $0x4] sm:$0xf]
        %v567 = vld [vmem:[#allocation2] sm:$0xf]
        %v568 = vld [vmem:[#allocation2 + $0x4] sm:$0xf]
        %v569 = vunpack.c.l.bf16 %v567
        %v570 = vunpack.c.l.bf16 %v568
        %v573 = vunpack.c.l.b16 %v565
        %v574 = vunpack.c.l.b16 %v566
        %v575 = vpack.c.b16 %v574, %v573
        %v578 = vunpack.c.l.b16 %v567
        %v579 = vunpack.c.l.b16 %v568
        %v580 = vpack.c.b16 %v579, %v578
        %vm582 = vcmask 130048
        %v584 = vsel %vm582, %v575, 0
        %586 = vmatpush.bf16.msra.mxu0 0
        %587 = vmatpush.bf16.msra.mxu0 0
        %588 = vmatpush.bf16.msra.mxu0 0
        %589 = vmatpush.bf16.msra.mxu0 0
        %590 = vmatpush.bf16.msra.mxu0 0
        %591 = vmatpush.bf16.msra.mxu0 0
        %592 = vmatpush.bf16.msra.mxu0 0
        %593 = vmatpush.bf16.msra.mxu0 %v580
        %594 = vmatmul.bf16.gmra.mxu0 %v584
        %v595 = vpop.f32.mrf.mxu0
        %v596 = vadd.f32 0.0, %v595
        %v597 = vpop.f32.mrf.mxu0
        %v598 = vadd.f32 0.0, %v597
        %599 = vdwg.mxu0
        %v600 = vpack.c.bf16 %v596, %v596
        %v601 = vpack.c.bf16 %v598, %v598
        %v604 = vunpack.c.l.b16 %v600
        %v605 = vunpack.c.l.b16 %v601
        %v606 = vpack.c.b16 %v605, %v604
        %608 = vmatpush.bf16.msra.mxu0 0
        %609 = vmatpush.bf16.msra.mxu0 0
        %610 = vmatpush.bf16.msra.mxu0 0
        %611 = vmatpush.bf16.msra.mxu0 0
        %612 = vmatpush.bf16.msra.mxu0 0
        %613 = vmatpush.bf16.msra.mxu0 0
        %614 = vmatpush.bf16.msra.mxu0 0
        %615 = vmatpush.bf16.msra.mxu0 %v606
        %616 = vmatmul.bf16.gmra.mxu0 %v584
        %v617 = vpop.f32.mrf.mxu0
        %v618 = vadd.f32 0.0, %v617
        %v619 = vpop.f32.mrf.mxu0
        %v620 = vadd.f32 0.0, %v619
        %621 = vdwg.mxu0
        %v622 = vmul.f32 %v618, 2.0
        %v623 = vmul.f32 %v620, 2.0
        %v624 = vsub.f32 %v622, %v569
        %v625 = vsub.f32 %v623, %v570
        %v626 = vpack.c.bf16 %v624, %v624
        %v627 = vpack.c.bf16 %v625, %v625
        %v630 = vunpack.c.l.b16 %v626
        %v631 = vunpack.c.l.b16 %v627
        %v632 = vpack.c.b16 %v631, %v630
        %v634 = vld [vmem:[%s461] sm:$0xf]
        %v635 = vld [vmem:[%s461 + $0x4] sm:$0xf]
        %v636 = vld [vmem:[%s461 + $0x8] sm:$0xf]
        %v637 = vld [vmem:[%s461 + $0xc] sm:$0xf]
        %v638 = vld [vmem:[%s461 + $0x10] sm:$0xf]
        %v639 = vld [vmem:[%s461 + $0x14] sm:$0xf]
        %v640 = vld [vmem:[%s461 + $0x18] sm:$0xf]
        %v641 = vld [vmem:[%s461 + $0x1c] sm:$0xf]
        %v642 = vld [vmem:[%s461 + $0x20] sm:$0xf]
        %v643 = vld [vmem:[%s461 + $0x24] sm:$0xf]
        %v644 = vld [vmem:[%s461 + $0x28] sm:$0xf]
        %v645 = vld [vmem:[%s461 + $0x2c] sm:$0xf]
        %v646 = vld [vmem:[%s461 + $0x30] sm:$0xf]
        %v647 = vld [vmem:[%s461 + $0x34] sm:$0xf]
        %v648 = vld [vmem:[%s461 + $0x38] sm:$0xf]
        %v649 = vld [vmem:[%s461 + $0x3c] sm:$0xf]
        %v650 = vld [vmem:[%s461 + $0x40] sm:$0xf]
        %v651 = vld [vmem:[%s461 + $0x44] sm:$0xf]
        %v652 = vld [vmem:[%s461 + $0x48] sm:$0xf]
        %v653 = vld [vmem:[%s461 + $0x4c] sm:$0xf]
        %v654 = vld [vmem:[%s461 + $0x50] sm:$0xf]
        %v655 = vld [vmem:[%s461 + $0x54] sm:$0xf]
        %v656 = vld [vmem:[%s461 + $0x58] sm:$0xf]
        %v657 = vld [vmem:[%s461 + $0x5c] sm:$0xf]
        %v658 = vld [vmem:[%s461 + $0x60] sm:$0xf]
        %v659 = vld [vmem:[%s461 + $0x64] sm:$0xf]
        %v660 = vld [vmem:[%s461 + $0x68] sm:$0xf]
        %v661 = vld [vmem:[%s461 + $0x6c] sm:$0xf]
        %v662 = vld [vmem:[%s461 + $0x70] sm:$0xf]
        %v663 = vld [vmem:[%s461 + $0x74] sm:$0xf]
        %v664 = vld [vmem:[%s461 + $0x78] sm:$0xf]
        %v665 = vld [vmem:[%s461 + $0x7c] sm:$0xf]
        %v666 = vld [vmem:[%s461 + $0x80] sm:$0xf]
        %v667 = vld [vmem:[%s461 + $0x84] sm:$0xf]
        %v668 = vld [vmem:[%s461 + $0x88] sm:$0xf]
        %v669 = vld [vmem:[%s461 + $0x8c] sm:$0xf]
        %v670 = vld [vmem:[%s461 + $0x90] sm:$0xf]
        %v671 = vld [vmem:[%s461 + $0x94] sm:$0xf]
        %v672 = vld [vmem:[%s461 + $0x98] sm:$0xf]
        %v673 = vld [vmem:[%s461 + $0x9c] sm:$0xf]
        %v674 = vld [vmem:[%s461 + $0xa0] sm:$0xf]
        %v675 = vld [vmem:[%s461 + $0xa4] sm:$0xf]
        %v676 = vld [vmem:[%s461 + $0xa8] sm:$0xf]
        %v677 = vld [vmem:[%s461 + $0xac] sm:$0xf]
        %v678 = vld [vmem:[%s461 + $0xb0] sm:$0xf]
        %v679 = vld [vmem:[%s461 + $0xb4] sm:$0xf]
        %v680 = vld [vmem:[%s461 + $0xb8] sm:$0xf]
        %v681 = vld [vmem:[%s461 + $0xbc] sm:$0xf]
        %v730 = vunpack.c.l.b16 %v634
        %v731 = vunpack.c.l.b16 %v635
        %v732 = vunpack.c.l.b16 %v636
        %v733 = vunpack.c.l.b16 %v637
        %v734 = vunpack.c.l.b16 %v638
        %v735 = vunpack.c.l.b16 %v639
        %v736 = vunpack.c.l.b16 %v640
        %v737 = vunpack.c.l.b16 %v641
        %v738 = vunpack.c.l.b16 %v642
        %v739 = vunpack.c.l.b16 %v643
        %v740 = vunpack.c.l.b16 %v644
        %v741 = vunpack.c.l.b16 %v645
        %v742 = vunpack.c.l.b16 %v646
        %v743 = vunpack.c.l.b16 %v647
        %v744 = vunpack.c.l.b16 %v648
        %v745 = vunpack.c.l.b16 %v649
        %v746 = vunpack.c.l.b16 %v650
        %v747 = vunpack.c.l.b16 %v651
        %v748 = vunpack.c.l.b16 %v652
        %v749 = vunpack.c.l.b16 %v653
        %v750 = vunpack.c.l.b16 %v654
        %v751 = vunpack.c.l.b16 %v655
        %v752 = vunpack.c.l.b16 %v656
        %v753 = vunpack.c.l.b16 %v657
        %v754 = vunpack.c.l.b16 %v658
        %v755 = vunpack.c.l.b16 %v659
        %v756 = vunpack.c.l.b16 %v660
        %v757 = vunpack.c.l.b16 %v661
        %v758 = vunpack.c.l.b16 %v662
        %v759 = vunpack.c.l.b16 %v663
        %v760 = vunpack.c.l.b16 %v664
        %v761 = vunpack.c.l.b16 %v665
        %v762 = vunpack.c.l.b16 %v666
        %v763 = vunpack.c.l.b16 %v667
        %v764 = vunpack.c.l.b16 %v668
        %v765 = vunpack.c.l.b16 %v669
        %v766 = vunpack.c.l.b16 %v670
        %v767 = vunpack.c.l.b16 %v671
        %v768 = vunpack.c.l.b16 %v672
        %v769 = vunpack.c.l.b16 %v673
        %v770 = vunpack.c.l.b16 %v674
        %v771 = vunpack.c.l.b16 %v675
        %v772 = vunpack.c.l.b16 %v676
        %v773 = vunpack.c.l.b16 %v677
        %v774 = vunpack.c.l.b16 %v678
        %v775 = vunpack.c.l.b16 %v679
        %v776 = vunpack.c.l.b16 %v680
        %v777 = vunpack.c.l.b16 %v681
        %v778 = vpack.c.b16 %v731, %v730
        %v779 = vpack.c.b16 %v733, %v732
        %v780 = vpack.c.b16 %v735, %v734
        %v781 = vpack.c.b16 %v737, %v736
        %v782 = vpack.c.b16 %v739, %v738
        %v783 = vpack.c.b16 %v741, %v740
        %v784 = vpack.c.b16 %v743, %v742
        %v785 = vpack.c.b16 %v745, %v744
        %v786 = vpack.c.b16 %v747, %v746
        %v787 = vpack.c.b16 %v749, %v748
        %v788 = vpack.c.b16 %v751, %v750
        %v789 = vpack.c.b16 %v753, %v752
        %v790 = vpack.c.b16 %v755, %v754
        %v791 = vpack.c.b16 %v757, %v756
        %v792 = vpack.c.b16 %v759, %v758
        %v793 = vpack.c.b16 %v761, %v760
        %v794 = vpack.c.b16 %v763, %v762
        %v795 = vpack.c.b16 %v765, %v764
        %v796 = vpack.c.b16 %v767, %v766
        %v797 = vpack.c.b16 %v769, %v768
        %v798 = vpack.c.b16 %v771, %v770
        %v799 = vpack.c.b16 %v773, %v772
        %v800 = vpack.c.b16 %v775, %v774
        %v801 = vpack.c.b16 %v777, %v776
        %826 = vmatpush.bf16.msra.mxu0 %v785
        %827 = vmatpush.bf16.msra.mxu0 %v784
        %828 = vmatpush.bf16.msra.mxu0 %v783
        %829 = vmatpush.bf16.msra.mxu0 %v782
        %830 = vmatpush.bf16.msra.mxu0 %v781
        %831 = vmatpush.bf16.msra.mxu0 %v780
        %832 = vmatpush.bf16.msra.mxu0 %v779
        %833 = vmatpush.bf16.msra.mxu0 %v778
        %834 = vmatmul.bf16.gmra.mxu0 %v580
        %v835 = vpop.f32.mrf.mxu0
        %v836 = vadd.f32 0.0, %v835
        %v837 = vpop.f32.mrf.mxu0
        %v838 = vadd.f32 0.0, %v837
        %839 = vdwg.mxu0
        %840 = vmatpush.bf16.msra.mxu0 %v793
        %841 = vmatpush.bf16.msra.mxu0 %v792
        %842 = vmatpush.bf16.msra.mxu0 %v791
        %843 = vmatpush.bf16.msra.mxu0 %v790
        %844 = vmatpush.bf16.msra.mxu0 %v789
        %845 = vmatpush.bf16.msra.mxu0 %v788
        %846 = vmatpush.bf16.msra.mxu0 %v787
        %847 = vmatpush.bf16.msra.mxu0 %v786
        %848 = vmatmul.bf16.gmra.mxu0 %v606
        %v849 = vpop.f32.mrf.mxu0
        %v850 = vadd.f32 %v836, %v849
        %v851 = vpop.f32.mrf.mxu0
        %v852 = vadd.f32 %v838, %v851
        %853 = vdwg.mxu0
        %854 = vmatpush.bf16.msra.mxu0 %v801
        %855 = vmatpush.bf16.msra.mxu0 %v800
        %856 = vmatpush.bf16.msra.mxu0 %v799
        %857 = vmatpush.bf16.msra.mxu0 %v798
        %858 = vmatpush.bf16.msra.mxu0 %v797
        %859 = vmatpush.bf16.msra.mxu0 %v796
        %860 = vmatpush.bf16.msra.mxu0 %v795
        %861 = vmatpush.bf16.msra.mxu0 %v794
        %862 = vmatmul.bf16.gmra.mxu0 %v632
        %v863 = vpop.f32.mrf.mxu0
        %v864 = vadd.f32 %v850, %v863
        %v865 = vpop.f32.mrf.mxu0
        %v866 = vadd.f32 %v852, %v865
        %867 = vdwg.mxu0
        %v868 = vld [vmem:[%s470] sm:$0x1]
        %v870 = vperm.slane %v868, 0
        %v872 = vmul.f32 %v864, %v870
        %v873 = vmul.f32 %v866, %v870
        %v874 = vld [vmem:[%s479] sm:$0x1]
        %v876 = vperm.slane %v874, 0
        %v878 = vadd.f32 %v872, %v876
        %v879 = vadd.f32 %v873, %v876
        %v880 = vmax.f32 %v878, 0.0
        %v881 = vmax.f32 %v879, 0.0
        %v882 = vpack.c.bf16 %v880, %v880
        %v883 = vpack.c.bf16 %v881, %v881
        %884 = vst [vmem:[#allocation2] sm:$0xf] %v882
        %885 = vst [vmem:[#allocation2 + $0x4] sm:$0xf] %v883
        %p886 = scmp.eq.s32.totalorder %s37, 3
        // Predicated region
        $region85: #{tpu_custom_call.1} parent=51 // pred_check
          %p887 = pneg %p886
        $region86: #{tpu_custom_call.1} parent=51 // pred_check_branch
          %889 = sbr.rel (%p887) target = $region88
        $region87: #{tpu_custom_call.1} parent=51 // pred_region
          %v890 = vld [vmem:[%s5] sm:$0x1]
          %v892 = vperm.slane %v890, 0
          %v894 = vmul.f32 %v880, %v892
          %v895 = vmul.f32 %v881, %v892
          %896 = vadd.xlane.f32.xlu0 %v894
          %v897 = vpop.xlane.xlu0 %896
          %898 = vadd.xlane.f32.xlu0 %v895
          %v899 = vpop.xlane.xlu0 %898
          %s900 = sld [smem:[#allocation14]]
          %v901 = vstv %s900
          %v902 = vadd.f32 %v897, %v901
          %v903 = vadd.f32 %v899, %v901
          %vm904 = vcmask 7168
          %905 = vst.msk [vmem:[%s551] sm:$0xff] %vm904, %v902
          %906 = vst.msk [vmem:[%s551 + $0x8] sm:$0xff] %vm904, %v903
          %v907 = vld [vmem:[#allocation12] sm:$0xff]
          %v908 = vld [vmem:[#allocation12 + $0x8] sm:$0xff]
          %v909 = vmul.f32 %v880, %v907
          %v910 = vmul.f32 %v881, %v908
          %911 = vadd.xlane.f32.xlu0 %v909
          %v912 = vpop.xlane.xlu0 %911
          %913 = vadd.xlane.f32.xlu0 %v910
          %v914 = vpop.xlane.xlu0 %913
          %v915 = vadd.f32 %v912, %v914
          %v916 = vrot.slane %v915, 4
          %v917 = vadd.f32 %v915, %v916
          %v918 = vrot.slane %v917, 2
          %v919 = vadd.f32 %v917, %v918
          %v920 = vrot.slane %v919, 1
          %v921 = vadd.f32 %v919, %v920
          %s922 = sld [smem:[#allocation14 + $0x1]]
          %v923 = vstv %s922
          %v924 = vadd.f32 %v921, %v923
          %vm925 = vcmask 0
          %926 = vst.msk [vmem:[%s555] sm:$0x1] %vm925, %v924
        $region88: #{tpu_custom_call.1} parent=51 // pred_fallthru
          _
        %s927 = smul.u32 2, %s36
        %p928 = scmp.lt.s32.totalorder %s927, 3
        %s929 = scalar_select %p928, %s927, 3
        %s930 = smul.addr %s929, 8
        %s931 = scalar_lea.vmem %s8, %s930
        %p932 = scmp.lt.s32.totalorder %s36, 1
        %s933 = scalar_select %p932, %s36, 1
        %s934 = scalar_lea.vmem %s9, %s933
        // Predicated region
        $region89: #{tpu_custom_call.1} parent=51 // pred_check
          %p935 = pneg %p255
        $region90: #{tpu_custom_call.1} parent=51 // pred_check_branch
          %937 = sbr.rel (%p935) target = $region92
        $region91: #{tpu_custom_call.1} parent=51 // pred_region
          %s938 = smul.u32 2, %s36
        $region92: #{tpu_custom_call.1} parent=51 // pred_fallthru
          _
        // Predicated region
        $region93: #{tpu_custom_call.1} parent=51 // pred_check
          %p939 = pneg %p281
        $region94: #{tpu_custom_call.1} parent=51 // pred_check_branch
          %941 = sbr.rel (%p939) target = $region96
        $region95: #{tpu_custom_call.1} parent=51 // pred_region
          _
        $region96: #{tpu_custom_call.1} parent=51 // pred_fallthru
          _
      $region52: #{tpu_custom_call.1} parent=5 // pred_fallthru
        _
      %p942 = scmp.le.s32.totalorder 2, %s27
      // Predicated region
      $region97: #{tpu_custom_call.1} parent=5 // pred_check
        %p943 = pneg %p942
      $region98: #{tpu_custom_call.1} parent=5 // pred_check_branch
        %945 = sbr.rel (%p943) target = $region100
      $region99: #{tpu_custom_call.1} parent=5 // pred_region
        %s946 = ssub.s32 %s27, 2
        // Predicated region
        $region101: #{tpu_custom_call.1} parent=99 // pred_check
          %p947 = pneg %p261
        $region102: #{tpu_custom_call.1} parent=99 // pred_check_branch
          %949 = sbr.rel (%p947) target = $region104
        $region103: #{tpu_custom_call.1} parent=99 // pred_region
          %s950 = smul.u32 2, %s38
          %p951 = scmp.lt.s32.totalorder %s950, 3
          %s952 = scalar_select %p951, %s950, 3
          %s953 = smul.addr %s952, 8
          %s954 = scalar_lea.vmem %s8, %s953
        $region104: #{tpu_custom_call.1} parent=99 // pred_fallthru
          _
        // Predicated region
        $region105: #{tpu_custom_call.1} parent=99 // pred_check
          %p955 = pneg %p287
        $region106: #{tpu_custom_call.1} parent=99 // pred_check_branch
          %957 = sbr.rel (%p955) target = $region108
        $region107: #{tpu_custom_call.1} parent=99 // pred_region
          %p958 = scmp.lt.s32.totalorder %s38, 1
          %s959 = scalar_select %p958, %s38, 1
          %s960 = scalar_lea.vmem %s9, %s959
        $region108: #{tpu_custom_call.1} parent=99 // pred_fallthru
          _
      $region100: #{tpu_custom_call.1} parent=5 // pred_fallthru
        _
    $region6: #{tpu_custom_call.1} parent=1 // loop_footer
      %s31 = sadd.s32 1, %s27
    $region7: #{tpu_custom_call.1} parent=1 // loop_footer_branch
      %26 = sbr.rel target = $region3
    $region8: #{tpu_custom_call.1} parent=1 // loop_exit
      _
    %961 = vsyncpa [#allocation4], 1
    %s962 = scalar_lea.sflag [#allocation4], 1
    %963 = vsyncpa %s962, 1
    %964 = vsyncpa [#allocation7], 1
    %s965 = scalar_lea.sflag [#allocation7], 1
    %966 = vsyncpa %s965, 1
    %967 = vsyncpa [#allocation10], 1
    %s968 = scalar_lea.sflag [#allocation10], 1
    %969 = vsyncpa %s968, 1
    %970 = vsyncpa [#allocation13], 1
    %971 = vsyncpa [#allocation5], 1
    %s972 = scalar_lea.sflag [#allocation5], 1
    %973 = vsyncpa %s972, 1

</llo_original>
